<compile_context>
chip_gen: v7x
topology: tpu7x:2x2x1
jax: 0.10.0
libtpu: 0.0.40
codegen_flags: <defaults>
</compile_context>

<pallas_src>
import functools

import jax
import jax.numpy as jnp
from jax import lax
from jax.experimental import pallas as pl
from jax.experimental.pallas import tpu as pltpu

OUT_CLASSES = 20              # len(CLASS_NAMES)
OUT_PAD = 128                 # lane-dense padded head width
INPUT_DIM = 512
HIDDEN_DIM = INPUT_DIM // 4   # 128 (module overrides the hidden_dim arg)
BN_EPS = 1e-5
TB_CAP = 1024                 # max batch-tile rows per grid step


def _mlp_kernel(x_ref, w0_ref, shift_ref, w2_ref, b2_ref, o_ref):
    """Fused: relu(x @ W0f^T + shift) @ W2p^T + b2p.

    x:   (TB, 512) bf16
    W0f: (128, 512) bf16   (PyTorch out,in layout, BN scale pre-folded)
    W2p: (128, 128) bf16   (20-class head zero-padded to 128)
    shift / b2p: (1, 128) f32
    Matmuls: bf16 x bf16 -> f32 on the MXU; epilogue f32 on the VPU.
    """
    # Linear 0 (+ folded BN scale): contract last dims == x @ W0f^T.
    h = lax.dot_general(
        x_ref[...], w0_ref[...],
        dimension_numbers=(((1,), (1,)), ((), ())),
        preferred_element_type=jnp.float32)                     # (TB, 128) f32

    # Folded BatchNorm shift + Linear-0 bias, then ReLU.
    h = jnp.maximum(h + shift_ref[...], 0.0)
    # Dropout(0.4) is identity in eval mode.

    # Linear 2 (padded head): bf16 x bf16 -> f32 on the MXU.
    o = lax.dot_general(
        h.astype(w2_ref.dtype), w2_ref[...],
        dimension_numbers=(((1,), (1,)), ((), ())),
        preferred_element_type=jnp.float32)                     # (TB, 128) f32
    o_ref[...] = (o + b2_ref[...]).astype(o_ref.dtype)


def prepare_params(params, dtype=jnp.bfloat16):
    """One-time fold/pad of the PyTorch-layout parameters (call once)."""
    inv_std = 1.0 / jnp.sqrt(params["bn_var"] + BN_EPS)
    scale = params["bn_gamma"] * inv_std                        # (128,)
    shift = (params["b0"] - params["bn_mean"]) * scale + params["bn_beta"]

    # Fold the BN scale into W0 (row-wise), removing a per-element VPU mul
    # from the kernel epilogue.
    w0_folded = params["w0"] * scale[:, None]                   # (128, 512)

    # Zero-pad the 20-class head to a lane-dense 128 columns.
    w2p = jnp.zeros((OUT_PAD, HIDDEN_DIM), params["w2"].dtype)
    w2p = w2p.at[:OUT_CLASSES].set(params["w2"])
    b2p = jnp.zeros((OUT_PAD,), params["b2"].dtype)
    b2p = b2p.at[:OUT_CLASSES].set(params["b2"])

    return {
        "w0": w0_folded.astype(dtype),                          # (128, 512)
        "shift": shift.reshape(1, HIDDEN_DIM).astype(jnp.float32),
        "w2": w2p.astype(dtype),                                # (128, 128)
        "b2": b2p.reshape(1, OUT_PAD).astype(jnp.float32),
    }


@jax.jit
def basic_classifier_forward(x, prep):
    """x: (B, 512) bf16 (stand-in for torch.HalfTensor). Returns (B, 20) bf16."""
    B = x.shape[0]

    # Round batch up to 16 (bf16 sublane packing) and tile it (bounded VMEM,
    # parallel across TensorCores on v7x).
    Bp = ((B + 15) // 16) * 16
    TB = min(Bp, TB_CAP)
    Bp = ((Bp + TB - 1) // TB) * TB
    if Bp != B:
        x = jnp.pad(x, ((0, Bp - B), (0, 0)))
    grid = (Bp // TB,)

    bytes_accessed = (
        Bp * INPUT_DIM * 2 + HIDDEN_DIM * INPUT_DIM * 2 + OUT_PAD * HIDDEN_DIM * 2
        + (HIDDEN_DIM + OUT_PAD) * 4 + Bp * OUT_PAD * 2)
    cost = pl.CostEstimate(
        flops=2 * Bp * INPUT_DIM * HIDDEN_DIM + 2 * Bp * HIDDEN_DIM * OUT_PAD,
        transcendentals=0,
        bytes_accessed=bytes_accessed)

    out = pl.pallas_call(
        _mlp_kernel,
        out_shape=jax.ShapeDtypeStruct((Bp, OUT_PAD), x.dtype),
        grid_spec=pltpu.PrefetchScalarGridSpec(
            num_scalar_prefetch=0,
            grid=grid,
            in_specs=[
                pl.BlockSpec((TB, INPUT_DIM), lambda b: (b, 0)),          # x tile
                pl.BlockSpec((HIDDEN_DIM, INPUT_DIM), lambda b: (0, 0)),  # W0 (folded)
                pl.BlockSpec((1, HIDDEN_DIM), lambda b: (0, 0)),          # shift
                pl.BlockSpec((OUT_PAD, HIDDEN_DIM), lambda b: (0, 0)),    # W2 pad
                pl.BlockSpec((1, OUT_PAD), lambda b: (0, 0)),             # b2 pad
            ],
            out_specs=pl.BlockSpec((TB, OUT_PAD), lambda b: (b, 0)),
        ),
        compiler_params=pltpu.CompilerParams(
            dimension_semantics=("parallel",)),
        cost_estimate=cost,
    )(x, prep["w0"], prep["shift"], prep["w2"], prep["b2"])

    return out[:B, :OUT_CLASSES]


def init_params(key):
    """Deterministic synthetic parameters matching the module's shapes."""
    k0, k1, k2, k3, k4, k5, k6, k7 = jax.random.split(key, 8)
    return {
        # PyTorch Linear weight convention: (out_features, in_features)
        "w0": jax.random.normal(k0, (HIDDEN_DIM, INPUT_DIM), jnp.float32)
              * (1.0 / jnp.sqrt(INPUT_DIM)),
        "b0": jax.random.normal(k1, (HIDDEN_DIM,), jnp.float32) * 0.01,
        "bn_gamma": 1.0 + 0.1 * jax.random.normal(k2, (HIDDEN_DIM,), jnp.float32),
        "bn_beta": 0.1 * jax.random.normal(k3, (HIDDEN_DIM,), jnp.float32),
        "bn_mean": 0.05 * jax.random.normal(k4, (HIDDEN_DIM,), jnp.float32),
        "bn_var": jnp.abs(1.0 + 0.1 * jax.random.normal(k5, (HIDDEN_DIM,),
                                                        jnp.float32)),
        "w2": jax.random.normal(k6, (OUT_CLASSES, HIDDEN_DIM), jnp.float32)
              * (1.0 / jnp.sqrt(HIDDEN_DIM)),
        "b2": jax.random.normal(k7, (OUT_CLASSES,), jnp.float32) * 0.01,
    }


def reference_forward(x, params):
    """Pure-JAX reference of the (eval-mode) PyTorch forward."""
    xf = x.astype(jnp.float32)
    h = xf @ params["w0"].T + params["b0"]
    h = (h - params["bn_mean"]) / jnp.sqrt(params["bn_var"] + BN_EPS)
    h = h * params["bn_gamma"] + params["bn_beta"]
    h = jnp.maximum(h, 0.0)
    o = h @ params["w2"].T + params["b2"]
    return o.astype(x.dtype)


if __name__ == "__main__":
    key = jax.random.PRNGKey(0)
    kx, kp = jax.random.split(key)

    B = 8  # small batch
    x = jax.random.normal(kx, (B, INPUT_DIM), jnp.float32).astype(jnp.bfloat16)
    params = init_params(kp)
    prep = prepare_params(params)     # one-time fold/pad (outside the hot path)

    out = basic_classifier_forward(x, prep)
    out = jax.block_until_ready(out)

    ref = reference_forward(x, params)
    assert out.shape == (B, OUT_CLASSES) and out.dtype == jnp.bfloat16
    err = jnp.max(jnp.abs(out.astype(jnp.float32) - ref.astype(jnp.float32)))
    assert float(err) < 2e-1, f"mismatch vs reference: {err}"

    print("KERNEL_OK")
</pallas_src>

<mosaic_0001>
module attributes {stable_mosaic.version = 11 : i64} {
  func.func @_mlp_kernel(%arg0: i32, %arg1: memref<16x512xbf16, #tpu.memory_space<vmem>>, %arg2: memref<128x512xbf16, #tpu.memory_space<vmem>>, %arg3: memref<1x128xf32, #tpu.memory_space<vmem>>, %arg4: memref<128x128xbf16, #tpu.memory_space<vmem>>, %arg5: memref<1x128xf32, #tpu.memory_space<vmem>>, %arg6: memref<16x128xbf16, #tpu.memory_space<vmem>>) attributes {dimension_semantics = [#tpu.dimension_semantics<parallel>], iteration_bounds = array<i64: 1>, scalar_prefetch = 0 : i64, scratch_operands = 0 : i64, tpu.core_type = #tpu.core_type<tc>, window_params = [{transform_indices = @transform_0, window_bounds = array<i64: 16, 512>}, {pipeline_mode = #tpu.pipeline_mode<synchronous>, transform_indices = @transform_1, window_bounds = array<i64: 128, 512>}, {pipeline_mode = #tpu.pipeline_mode<synchronous>, transform_indices = @transform_2, window_bounds = array<i64: 1, 128>}, {pipeline_mode = #tpu.pipeline_mode<synchronous>, transform_indices = @transform_3, window_bounds = array<i64: 128, 128>}, {pipeline_mode = #tpu.pipeline_mode<synchronous>, transform_indices = @transform_4, window_bounds = array<i64: 1, 128>}, {transform_indices = @transform_5, window_bounds = array<i64: 16, 128>}]} {
    %c0 = arith.constant 0 : index
    %c0_0 = arith.constant 0 : index
    %0 = vector.load %arg1[%c0, %c0_0] : memref<16x512xbf16, #tpu.memory_space<vmem>>, vector<16x512xbf16>
    %c0_1 = arith.constant 0 : index
    %c0_2 = arith.constant 0 : index
    %1 = vector.load %arg2[%c0_1, %c0_2] : memref<128x512xbf16, #tpu.memory_space<vmem>>, vector<128x512xbf16>
    %cst = arith.constant dense<0.000000e+00> : vector<16x128xf32>
    %2 = tpu.matmul %0, %1, %cst {dimension_numbers = #tpu.dot_dimension_numbers<[1], [1], [0], [0], [0, 0, 1, 0], [], []>} : vector<16x512xbf16>, vector<128x512xbf16>, vector<16x128xf32> -> vector<16x128xf32>
    %c0_3 = arith.constant 0 : index
    %c0_4 = arith.constant 0 : index
    %3 = vector.load %arg3[%c0_3, %c0_4] : memref<1x128xf32, #tpu.memory_space<vmem>>, vector<1x128xf32>
    %4 = vector.broadcast %3 : vector<1x128xf32> to vector<16x128xf32>
    %5 = arith.addf %2, %4 : vector<16x128xf32>
    %cst_5 = arith.constant 0.000000e+00 : f32
    %6 = vector.broadcast %cst_5 : f32 to vector<16x128xf32>
    %7 = arith.maximumf %5, %6 : vector<16x128xf32>
    %8 = arith.truncf %7 : vector<16x128xf32> to vector<16x128xbf16>
    %c0_6 = arith.constant 0 : index
    %c0_7 = arith.constant 0 : index
    %9 = vector.load %arg4[%c0_6, %c0_7] : memref<128x128xbf16, #tpu.memory_space<vmem>>, vector<128x128xbf16>
    %cst_8 = arith.constant dense<0.000000e+00> : vector<16x128xf32>
    %10 = tpu.matmul %8, %9, %cst_8 {dimension_numbers = #tpu.dot_dimension_numbers<[1], [1], [0], [0], [0, 0, 1, 0], [], []>} : vector<16x128xbf16>, vector<128x128xbf16>, vector<16x128xf32> -> vector<16x128xf32>
    %c0_9 = arith.constant 0 : index
    %c0_10 = arith.constant 0 : index
    %11 = vector.load %arg5[%c0_9, %c0_10] : memref<1x128xf32, #tpu.memory_space<vmem>>, vector<1x128xf32>
    %12 = vector.broadcast %11 : vector<1x128xf32> to vector<16x128xf32>
    %13 = arith.addf %10, %12 : vector<16x128xf32>
    %14 = arith.truncf %13 : vector<16x128xf32> to vector<16x128xbf16>
    %c0_11 = arith.constant 0 : index
    %c0_12 = arith.constant 0 : index
    %15 = vector.load %arg6[%c0_11, %c0_12] : memref<16x128xbf16, #tpu.memory_space<vmem>>, vector<16x128xbf16>
    tpu.vector_store %arg6[%c0_11, %c0_12], %14 {strides = array<i32>} : memref<16x128xbf16, #tpu.memory_space<vmem>>, vector<16x128xbf16>,
    return
  }
  func.func @transform_0(%arg0: i32) -> (i32, i32) {
    %c0_i32 = arith.constant 0 : i32
    %c0_i32_0 = arith.constant 0 : i32
    return %arg0, %c0_i32 : i32, i32
  }
  func.func @transform_1(%arg0: i32) -> (i32, i32) {
    %c0_i32 = arith.constant 0 : i32
    %c0_i32_0 = arith.constant 0 : i32
    %c0_i32_1 = arith.constant 0 : i32
    return %c0_i32, %c0_i32_0 : i32, i32
  }
  func.func @transform_2(%arg0: i32) -> (i32, i32) {
    %c0_i32 = arith.constant 0 : i32
    %c0_i32_0 = arith.constant 0 : i32
    %c0_i32_1 = arith.constant 0 : i32
    return %c0_i32, %c0_i32_0 : i32, i32
  }
  func.func @transform_3(%arg0: i32) -> (i32, i32) {
    %c0_i32 = arith.constant 0 : i32
    %c0_i32_0 = arith.constant 0 : i32
    %c0_i32_1 = arith.constant 0 : i32
    return %c0_i32, %c0_i32_0 : i32, i32
  }
  func.func @transform_4(%arg0: i32) -> (i32, i32) {
    %c0_i32 = arith.constant 0 : i32
    %c0_i32_0 = arith.constant 0 : i32
    %c0_i32_1 = arith.constant 0 : i32
    return %c0_i32, %c0_i32_0 : i32, i32
  }
  func.func @transform_5(%arg0: i32) -> (i32, i32) {
    %c0_i32 = arith.constant 0 : i32
    %c0_i32_0 = arith.constant 0 : i32
    return %arg0, %c0_i32 : i32, i32
  }
}

</mosaic_0001>

<llo_original>
// kernel: basic_classifier_forward.1
$region0: #{basic_classifier_forward.1}
  #allocation0 [shape = 'u32[]', space=smem, size = 0x4, offset = 0x4, fixed_abs, tag = 'smem constant byte address 0x4 - core index']
  #allocation1 [shape = 'u32[144,128]{1,0:T(1,128)}', space=vmem, size = 0x12000, scoped, tag = 'internal scratch']
  %s0 = inlined_call_operand.vmem [shape: bf16[16,512], index: 0, kind: input, shape index: {}]
  %s1 = inlined_call_operand.hbm [shape: bf16[128,512], index: 1, kind: input, shape index: {}]
  %s2 = inlined_call_operand.hbm [shape: f32[1,128], index: 2, kind: input, shape index: {}]
  %s3 = inlined_call_operand.vmem [shape: bf16[128,128], index: 3, kind: input, shape index: {}]
  %s4 = inlined_call_operand.hbm [shape: f32[1,128], index: 4, kind: input, shape index: {}]
  %s5 = inlined_call_operand.vmem [shape: bf16[16,128], index: 5, kind: output, shape index: {}]
  %s6 = sld [smem:[#allocation0]]
  $region42: #{basic_classifier_forward.1} parent=0
    _
  %s8 = ssub.s32 1, %s6
  %s9 = scalar_select 0, %s8, %s6
  $region1: #{basic_classifier_forward.1} parent=0
    #allocation2 [shape = 'u8[131072]{0}', space=vmem, size = 0x20000, scoped, tag = 'input window, operand 1, single buffered']
    #allocation3 [shape = 's32[1]{0}', space=sflag, size = 0x4, scoped, tag = 'scoped memory for basic_classifier_forward.1']
    #allocation4 [shape = 'u8[512]{0}', space=vmem, size = 0x400, scoped, tag = 'input window, operand 2, single buffered']
    #allocation5 [shape = 's32[1]{0}', space=sflag, size = 0x4, scoped, tag = 'scoped memory for basic_classifier_forward.1']
    #allocation6 [shape = 'u8[512]{0}', space=vmem, size = 0x400, scoped, tag = 'input window, operand 4, single buffered']
    %10 = vsyncpa [#allocation3], 0
    %11 = vsyncpa [#allocation5], 0
    // Predicated region
    $region2: #{basic_classifier_forward.1} parent=1 // pred_check
      _
    $region3: #{basic_classifier_forward.1} parent=1 // pred_check_branch
      %13 = sbr.rel (0) target = $region5
    $region4: #{basic_classifier_forward.1} parent=1 // pred_region
      _
    $region5: #{basic_classifier_forward.1} parent=1 // pred_fallthru
      _
    // Predicated region
    $region6: #{basic_classifier_forward.1} parent=1 // pred_check
      _
    $region7: #{basic_classifier_forward.1} parent=1 // pred_check_branch
      %15 = sbr.rel (0) target = $region9
    $region8: #{basic_classifier_forward.1} parent=1 // pred_region
      %s17 = ssub.s32 4096, 4096
      %18 = vsyncadd [#allocation3], %s17
      %s19 = sshll.u32 [#allocation2], 4
      %s20 = int_to_ptr.vmem [resolvable:$true] %s19
      %25 = dma.hbm_to_vmem [thread:$0]  %s1, 4096, %s20, [#allocation3], 256, 256, 16
    $region9: #{basic_classifier_forward.1} parent=1 // pred_fallthru
      _
    // Predicated region
    $region10: #{basic_classifier_forward.1} parent=1 // pred_check
      _
    $region11: #{basic_classifier_forward.1} parent=1 // pred_check_branch
      %27 = sbr.rel (0) target = $region13
    $region12: #{basic_classifier_forward.1} parent=1 // pred_region
      %s29 = ssub.s32 16, 16
      %30 = vsyncadd [#allocation5], %s29
      %s32 = sshll.u32 [#allocation4], 4
      %s33 = int_to_ptr.vmem [resolvable:$true] %s32
      %35 = dma.hbm_to_vmem [thread:$0]  %s2, 16, %s33, [#allocation5]
    $region13: #{basic_classifier_forward.1} parent=1 // pred_fallthru
      _
    // Predicated region
    $region14: #{basic_classifier_forward.1} parent=1 // pred_check
      _
    $region15: #{basic_classifier_forward.1} parent=1 // pred_check_branch
      %37 = sbr.rel (0) target = $region17
    $region16: #{basic_classifier_forward.1} parent=1 // pred_region
      _
    $region17: #{basic_classifier_forward.1} parent=1 // pred_fallthru
      _
    // Predicated region
    $region18: #{basic_classifier_forward.1} parent=1 // pred_check
      _
    $region19: #{basic_classifier_forward.1} parent=1 // pred_check_branch
      %39 = sbr.rel (0) target = $region21
    $region20: #{basic_classifier_forward.1} parent=1 // pred_region
      %s41 = ssub.s32 16, 16
      %42 = vsyncadd [#allocation5], %s41
      %s44 = sshll.u32 [#allocation6], 4
      %s45 = int_to_ptr.vmem [resolvable:$true] %s44
      %47 = dma.hbm_to_vmem [thread:$0]  %s4, 16, %s45, [#allocation5]
    $region21: #{basic_classifier_forward.1} parent=1 // pred_fallthru
      _
    // Predicated region
    $region22: #{basic_classifier_forward.1} parent=1 // pred_check
      _
    $region23: #{basic_classifier_forward.1} parent=1 // pred_check_branch
      %49 = sbr.rel (0) target = $region25
    $region24: #{basic_classifier_forward.1} parent=1 // pred_region
      %50 = dma.done [#allocation3], 4096
    $region25: #{basic_classifier_forward.1} parent=1 // pred_fallthru
      _
    // Predicated region
    $region26: #{basic_classifier_forward.1} parent=1 // pred_check
      _
    $region27: #{basic_classifier_forward.1} parent=1 // pred_check_branch
      %52 = sbr.rel (0) target = $region29
    $region28: #{basic_classifier_forward.1} parent=1 // pred_region
      %53 = dma.done [#allocation5], 16
    $region29: #{basic_classifier_forward.1} parent=1 // pred_fallthru
      _
    // Predicated region
    $region30: #{basic_classifier_forward.1} parent=1 // pred_check
      _
    $region31: #{basic_classifier_forward.1} parent=1 // pred_check_branch
      %55 = sbr.rel (0) target = $region33
    $region32: #{basic_classifier_forward.1} parent=1 // pred_region
      %56 = dma.done [#allocation5], 16
    $region33: #{basic_classifier_forward.1} parent=1 // pred_fallthru
      _
    %v58 = vld [vmem:[%s0] sm:$0xff]
    %v59 = vld [vmem:[%s0 + $0x8] sm:$0xff]
    %v60 = vld [vmem:[%s0 + $0x10] sm:$0xff]
    %v61 = vld [vmem:[%s0 + $0x18] sm:$0xff]
    %v62 = vld [vmem:[#allocation2] sm:$0xff]
    %v63 = vld [vmem:[#allocation2 + $0x8] sm:$0xff]
    %v64 = vld [vmem:[#allocation2 + $0x10] sm:$0xff]
    %v65 = vld [vmem:[#allocation2 + $0x18] sm:$0xff]
    %v66 = vld [vmem:[#allocation2 + $0x20] sm:$0xff]
    %v67 = vld [vmem:[#allocation2 + $0x28] sm:$0xff]
    %v68 = vld [vmem:[#allocation2 + $0x30] sm:$0xff]
    %v69 = vld [vmem:[#allocation2 + $0x38] sm:$0xff]
    %v70 = vld [vmem:[#allocation2 + $0x40] sm:$0xff]
    %v71 = vld [vmem:[#allocation2 + $0x48] sm:$0xff]
    %v72 = vld [vmem:[#allocation2 + $0x50] sm:$0xff]
    %v73 = vld [vmem:[#allocation2 + $0x58] sm:$0xff]
    %v74 = vld [vmem:[#allocation2 + $0x60] sm:$0xff]
    %v75 = vld [vmem:[#allocation2 + $0x68] sm:$0xff]
    %v76 = vld [vmem:[#allocation2 + $0x70] sm:$0xff]
    %v77 = vld [vmem:[#allocation2 + $0x78] sm:$0xff]
    %v78 = vld [vmem:[#allocation2 + $0x80] sm:$0xff]
    %v79 = vld [vmem:[#allocation2 + $0x88] sm:$0xff]
    %v80 = vld [vmem:[#allocation2 + $0x90] sm:$0xff]
    %v81 = vld [vmem:[#allocation2 + $0x98] sm:$0xff]
    %v82 = vld [vmem:[#allocation2 + $0xa0] sm:$0xff]
    %v83 = vld [vmem:[#allocation2 + $0xa8] sm:$0xff]
    %v84 = vld [vmem:[#allocation2 + $0xb0] sm:$0xff]
    %v85 = vld [vmem:[#allocation2 + $0xb8] sm:$0xff]
    %v86 = vld [vmem:[#allocation2 + $0xc0] sm:$0xff]
    %v87 = vld [vmem:[#allocation2 + $0xc8] sm:$0xff]
    %v88 = vld [vmem:[#allocation2 + $0xd0] sm:$0xff]
    %v89 = vld [vmem:[#allocation2 + $0xd8] sm:$0xff]
    %v90 = vld [vmem:[#allocation2 + $0xe0] sm:$0xff]
    %v91 = vld [vmem:[#allocation2 + $0xe8] sm:$0xff]
    %v92 = vld [vmem:[#allocation2 + $0xf0] sm:$0xff]
    %v93 = vld [vmem:[#allocation2 + $0xf8] sm:$0xff]
    %v94 = vld [vmem:[#allocation4] sm:$0x1]
    %v96 = vlaneseq
    %v97 = vshrl.u32 %v96, 7
    %v98 = vsub.s32 0, %v97
    %v99 = vrot.slane %v94, %v98
    %v105 = vunpack.c.l.b16 %v58
    %v106 = vunpack.c.h.b16 %v58
    %v107 = vunpack.c.l.b16 %v59
    %v108 = vunpack.c.h.b16 %v59
    %v109 = vunpack.c.l.b16 %v60
    %v110 = vunpack.c.h.b16 %v60
    %v111 = vunpack.c.l.b16 %v61
    %v112 = vunpack.c.h.b16 %v61
    %v113 = vpack.c.b16 %v109, %v105
    %v114 = vpack.c.b16 %v110, %v106
    %v115 = vpack.c.b16 %v111, %v107
    %v116 = vpack.c.b16 %v112, %v108
    %v153 = vunpack.c.l.b16 %v62
    %v154 = vunpack.c.h.b16 %v62
    %v155 = vunpack.c.l.b16 %v63
    %v156 = vunpack.c.h.b16 %v63
    %v157 = vunpack.c.l.b16 %v64
    %v158 = vunpack.c.h.b16 %v64
    %v159 = vunpack.c.l.b16 %v65
    %v160 = vunpack.c.h.b16 %v65
    %v161 = vunpack.c.l.b16 %v66
    %v162 = vunpack.c.h.b16 %v66
    %v163 = vunpack.c.l.b16 %v67
    %v164 = vunpack.c.h.b16 %v67
    %v165 = vunpack.c.l.b16 %v68
    %v166 = vunpack.c.h.b16 %v68
    %v167 = vunpack.c.l.b16 %v69
    %v168 = vunpack.c.h.b16 %v69
    %v169 = vunpack.c.l.b16 %v70
    %v170 = vunpack.c.h.b16 %v70
    %v171 = vunpack.c.l.b16 %v71
    %v172 = vunpack.c.h.b16 %v71
    %v173 = vunpack.c.l.b16 %v72
    %v174 = vunpack.c.h.b16 %v72
    %v175 = vunpack.c.l.b16 %v73
    %v176 = vunpack.c.h.b16 %v73
    %v177 = vunpack.c.l.b16 %v74
    %v178 = vunpack.c.h.b16 %v74
    %v179 = vunpack.c.l.b16 %v75
    %v180 = vunpack.c.h.b16 %v75
    %v181 = vunpack.c.l.b16 %v76
    %v182 = vunpack.c.h.b16 %v76
    %v183 = vunpack.c.l.b16 %v77
    %v184 = vunpack.c.h.b16 %v77
    %v185 = vunpack.c.l.b16 %v78
    %v186 = vunpack.c.h.b16 %v78
    %v187 = vunpack.c.l.b16 %v79
    %v188 = vunpack.c.h.b16 %v79
    %v189 = vunpack.c.l.b16 %v80
    %v190 = vunpack.c.h.b16 %v80
    %v191 = vunpack.c.l.b16 %v81
    %v192 = vunpack.c.h.b16 %v81
    %v193 = vunpack.c.l.b16 %v82
    %v194 = vunpack.c.h.b16 %v82
    %v195 = vunpack.c.l.b16 %v83
    %v196 = vunpack.c.h.b16 %v83
    %v197 = vunpack.c.l.b16 %v84
    %v198 = vunpack.c.h.b16 %v84
    %v199 = vunpack.c.l.b16 %v85
    %v200 = vunpack.c.h.b16 %v85
    %v201 = vunpack.c.l.b16 %v86
    %v202 = vunpack.c.h.b16 %v86
    %v203 = vunpack.c.l.b16 %v87
    %v204 = vunpack.c.h.b16 %v87
    %v205 = vunpack.c.l.b16 %v88
    %v206 = vunpack.c.h.b16 %v88
    %v207 = vunpack.c.l.b16 %v89
    %v208 = vunpack.c.h.b16 %v89
    %v209 = vunpack.c.l.b16 %v90
    %v210 = vunpack.c.h.b16 %v90
    %v211 = vunpack.c.l.b16 %v91
    %v212 = vunpack.c.h.b16 %v91
    %v213 = vunpack.c.l.b16 %v92
    %v214 = vunpack.c.h.b16 %v92
    %v215 = vunpack.c.l.b16 %v93
    %v216 = vunpack.c.h.b16 %v93
    %v217 = vpack.c.b16 %v157, %v153
    %v218 = vpack.c.b16 %v158, %v154
    %v219 = vpack.c.b16 %v159, %v155
    %v220 = vpack.c.b16 %v160, %v156
    %v221 = vpack.c.b16 %v165, %v161
    %v222 = vpack.c.b16 %v166, %v162
    %v223 = vpack.c.b16 %v167, %v163
    %v224 = vpack.c.b16 %v168, %v164
    %v225 = vpack.c.b16 %v173, %v169
    %v226 = vpack.c.b16 %v174, %v170
    %v227 = vpack.c.b16 %v175, %v171
    %v228 = vpack.c.b16 %v176, %v172
    %v229 = vpack.c.b16 %v181, %v177
    %v230 = vpack.c.b16 %v182, %v178
    %v231 = vpack.c.b16 %v183, %v179
    %v232 = vpack.c.b16 %v184, %v180
    %v233 = vpack.c.b16 %v189, %v185
    %v234 = vpack.c.b16 %v190, %v186
    %v235 = vpack.c.b16 %v191, %v187
    %v236 = vpack.c.b16 %v192, %v188
    %v237 = vpack.c.b16 %v197, %v193
    %v238 = vpack.c.b16 %v198, %v194
    %v239 = vpack.c.b16 %v199, %v195
    %v240 = vpack.c.b16 %v200, %v196
    %v241 = vpack.c.b16 %v205, %v201
    %v242 = vpack.c.b16 %v206, %v202
    %v243 = vpack.c.b16 %v207, %v203
    %v244 = vpack.c.b16 %v208, %v204
    %v245 = vpack.c.b16 %v213, %v209
    %v246 = vpack.c.b16 %v214, %v210
    %v247 = vpack.c.b16 %v215, %v211
    %v248 = vpack.c.b16 %v216, %v212
    %281 = vmatprep.subr.bf16.mxu0 %v218
    %282 = vmatpush1.bf16.xpose.msra.mxu0 %v217
    %283 = vmatprep.subr.bf16.mxu0 %v222
    %284 = vmatpush1.bf16.xpose.msra.mxu0 %v221
    %285 = vmatprep.subr.bf16.mxu0 %v226
    %286 = vmatpush1.bf16.xpose.msra.mxu0 %v225
    %287 = vmatprep.subr.bf16.mxu0 %v230
    %288 = vmatpush1.bf16.xpose.msra.mxu0 %v229
    %289 = vmatprep.subr.bf16.mxu0 %v234
    %290 = vmatpush1.bf16.xpose.msra.mxu0 %v233
    %291 = vmatprep.subr.bf16.mxu0 %v238
    %292 = vmatpush1.bf16.xpose.msra.mxu0 %v237
    %293 = vmatprep.subr.bf16.mxu0 %v242
    %294 = vmatpush1.bf16.xpose.msra.mxu0 %v241
    %295 = vmatprep.subr.bf16.mxu0 %v246
    %296 = vmatpush1.bf16.xpose.msra.mxu0 %v245
    %297 = vmatprep.subr.bf16.mxu0 0
    %298 = vmatpush1.bf16.xpose.msra.mxu0 0
    %299 = vmatprep.subr.bf16.mxu0 0
    %300 = vmatpush1.bf16.xpose.msra.mxu0 0
    %301 = vmatprep.subr.bf16.mxu0 0
    %302 = vmatpush1.bf16.xpose.msra.mxu0 0
    %303 = vmatprep.subr.bf16.mxu0 0
    %304 = vmatpush1.bf16.xpose.msra.mxu0 0
    %305 = vmatprep.subr.bf16.mxu0 0
    %306 = vmatpush1.bf16.xpose.msra.mxu0 0
    %307 = vmatprep.subr.bf16.mxu0 0
    %308 = vmatpush1.bf16.xpose.msra.mxu0 0
    %309 = vmatprep.subr.bf16.mxu0 0
    %310 = vmatpush1.bf16.xpose.msra.mxu0 0
    %311 = vmatprep.subr.bf16.mxu0 0
    %312 = vmatpush1.bf16.xpose.msra.mxu0 0
    %313 = vmatprep.mubr.bf16.mxu0 %v114
    %314 = vmatmul.mubr.bf16.gmra.mrb[0].mxu0 %v113
    %v315 = vpop.f32.mrb[0].mxu0
    %v316 = vadd.f32 %v99, %v315
    %v317 = vpop.f32.mrb[0].mxu0
    %v318 = vpop.f32.mrb[0].mxu0
    %v319 = vadd.f32 %v99, %v318
    %v320 = vpop.f32.mrb[0].mxu0
    %321 = vdwg.mxu0
    %322 = vmatprep.subr.bf16.mxu0 %v220
    %323 = vmatpush1.bf16.xpose.msra.mxu0 %v219
    %324 = vmatprep.subr.bf16.mxu0 %v224
    %325 = vmatpush1.bf16.xpose.msra.mxu0 %v223
    %326 = vmatprep.subr.bf16.mxu0 %v228
    %327 = vmatpush1.bf16.xpose.msra.mxu0 %v227
    %328 = vmatprep.subr.bf16.mxu0 %v232
    %329 = vmatpush1.bf16.xpose.msra.mxu0 %v231
    %330 = vmatprep.subr.bf16.mxu0 %v236
    %331 = vmatpush1.bf16.xpose.msra.mxu0 %v235
    %332 = vmatprep.subr.bf16.mxu0 %v240
    %333 = vmatpush1.bf16.xpose.msra.mxu0 %v239
    %334 = vmatprep.subr.bf16.mxu0 %v244
    %335 = vmatpush1.bf16.xpose.msra.mxu0 %v243
    %336 = vmatprep.subr.bf16.mxu0 %v248
    %337 = vmatpush1.bf16.xpose.msra.mxu0 %v247
    %338 = vmatprep.subr.bf16.mxu0 0
    %339 = vmatpush1.bf16.xpose.msra.mxu0 0
    %340 = vmatprep.subr.bf16.mxu0 0
    %341 = vmatpush1.bf16.xpose.msra.mxu0 0
    %342 = vmatprep.subr.bf16.mxu0 0
    %343 = vmatpush1.bf16.xpose.msra.mxu0 0
    %344 = vmatprep.subr.bf16.mxu0 0
    %345 = vmatpush1.bf16.xpose.msra.mxu0 0
    %346 = vmatprep.subr.bf16.mxu0 0
    %347 = vmatpush1.bf16.xpose.msra.mxu0 0
    %348 = vmatprep.subr.bf16.mxu0 0
    %349 = vmatpush1.bf16.xpose.msra.mxu0 0
    %350 = vmatprep.subr.bf16.mxu0 0
    %351 = vmatpush1.bf16.xpose.msra.mxu0 0
    %352 = vmatprep.subr.bf16.mxu0 0
    %353 = vmatpush1.bf16.xpose.msra.mxu0 0
    %354 = vmatprep.mubr.bf16.mxu0 %v116
    %355 = vmatmul.mubr.bf16.gmra.mrb[0].mxu0 %v115
    %v356 = vpop.f32.mrb[0].mxu0
    %v357 = vadd.f32 %v316, %v356
    %v358 = vpop.f32.mrb[0].mxu0
    %v359 = vpop.f32.mrb[0].mxu0
    %v360 = vadd.f32 %v319, %v359
    %v361 = vpop.f32.mrb[0].mxu0
    %362 = vdwg.mxu0
    %v363 = vmax.f32 %v357, 0.0
    %v364 = vmax.f32 %v360, 0.0
    %v365 = vpack.c.bf16 %v364, %v363
    %v366 = vld [vmem:[%s3] sm:$0xf]
    %v367 = vld [vmem:[%s3 + $0x4] sm:$0xf]
    %v368 = vld [vmem:[%s3 + $0x8] sm:$0xf]
    %v369 = vld [vmem:[%s3 + $0xc] sm:$0xf]
    %v370 = vld [vmem:[%s3 + $0x10] sm:$0xf]
    %v371 = vld [vmem:[%s3 + $0x14] sm:$0xf]
    %v372 = vld [vmem:[%s3 + $0x18] sm:$0xf]
    %v373 = vld [vmem:[%s3 + $0x1c] sm:$0xf]
    %v374 = vld [vmem:[%s3 + $0x20] sm:$0xf]
    %v375 = vld [vmem:[%s3 + $0x24] sm:$0xf]
    %v376 = vld [vmem:[%s3 + $0x28] sm:$0xf]
    %v377 = vld [vmem:[%s3 + $0x2c] sm:$0xf]
    %v378 = vld [vmem:[%s3 + $0x30] sm:$0xf]
    %v379 = vld [vmem:[%s3 + $0x34] sm:$0xf]
    %v380 = vld [vmem:[%s3 + $0x38] sm:$0xf]
    %v381 = vld [vmem:[%s3 + $0x3c] sm:$0xf]
    %v382 = vld [vmem:[#allocation6] sm:$0x1]
    %v384 = vlaneseq
    %v385 = vshrl.u32 %v384, 7
    %v386 = vsub.s32 0, %v385
    %v387 = vrot.slane %v382, %v386
    %v405 = vunpack.c.l.b16 %v366
    %v406 = vunpack.c.l.b16 %v367
    %v407 = vunpack.c.l.b16 %v368
    %v408 = vunpack.c.l.b16 %v369
    %v409 = vunpack.c.l.b16 %v370
    %v410 = vunpack.c.l.b16 %v371
    %v411 = vunpack.c.l.b16 %v372
    %v412 = vunpack.c.l.b16 %v373
    %v413 = vunpack.c.l.b16 %v374
    %v414 = vunpack.c.l.b16 %v375
    %v415 = vunpack.c.l.b16 %v376
    %v416 = vunpack.c.l.b16 %v377
    %v417 = vunpack.c.l.b16 %v378
    %v418 = vunpack.c.l.b16 %v379
    %v419 = vunpack.c.l.b16 %v380
    %v420 = vunpack.c.l.b16 %v381
    %v421 = vpack.c.b16 %v406, %v405
    %v422 = vpack.c.b16 %v408, %v407
    %v423 = vpack.c.b16 %v410, %v409
    %v424 = vpack.c.b16 %v412, %v411
    %v425 = vpack.c.b16 %v414, %v413
    %v426 = vpack.c.b16 %v416, %v415
    %v427 = vpack.c.b16 %v418, %v417
    %v428 = vpack.c.b16 %v420, %v419
    %437 = vmatprep.subr.bf16.mxu0 0
    %438 = vmatpush1.bf16.xpose.msra.mxu0 %v421
    %439 = vmatprep.subr.bf16.mxu0 0
    %440 = vmatpush1.bf16.xpose.msra.mxu0 %v422
    %441 = vmatprep.subr.bf16.mxu0 0
    %442 = vmatpush1.bf16.xpose.msra.mxu0 %v423
    %443 = vmatprep.subr.bf16.mxu0 0
    %444 = vmatpush1.bf16.xpose.msra.mxu0 %v424
    %445 = vmatprep.subr.bf16.mxu0 0
    %446 = vmatpush1.bf16.xpose.msra.mxu0 %v425
    %447 = vmatprep.subr.bf16.mxu0 0
    %448 = vmatpush1.bf16.xpose.msra.mxu0 %v426
    %449 = vmatprep.subr.bf16.mxu0 0
    %450 = vmatpush1.bf16.xpose.msra.mxu0 %v427
    %451 = vmatprep.subr.bf16.mxu0 0
    %452 = vmatpush1.bf16.xpose.msra.mxu0 %v428
    %453 = vmatprep.subr.bf16.mxu0 0
    %454 = vmatpush1.bf16.xpose.msra.mxu0 0
    %455 = vmatprep.subr.bf16.mxu0 0
    %456 = vmatpush1.bf16.xpose.msra.mxu0 0
    %457 = vmatprep.subr.bf16.mxu0 0
    %458 = vmatpush1.bf16.xpose.msra.mxu0 0
    %459 = vmatprep.subr.bf16.mxu0 0
    %460 = vmatpush1.bf16.xpose.msra.mxu0 0
    %461 = vmatprep.subr.bf16.mxu0 0
    %462 = vmatpush1.bf16.xpose.msra.mxu0 0
    %463 = vmatprep.subr.bf16.mxu0 0
    %464 = vmatpush1.bf16.xpose.msra.mxu0 0
    %465 = vmatprep.subr.bf16.mxu0 0
    %466 = vmatpush1.bf16.xpose.msra.mxu0 0
    %467 = vmatprep.subr.bf16.mxu0 0
    %468 = vmatpush1.bf16.xpose.msra.mxu0 0
    %469 = vmatprep.mubr.bf16.mxu0 0
    %470 = vmatmul.mubr.bf16.gmra.mrb[0].mxu0 %v365
    %v471 = vpop.f32.mrb[0].mxu0
    %v472 = vadd.f32 %v387, %v471
    %v473 = vpop.f32.mrb[0].mxu0
    %v474 = vpop.f32.mrb[0].mxu0
    %v475 = vadd.f32 %v387, %v474
    %v476 = vpop.f32.mrb[0].mxu0
    %477 = vdwg.mxu0
    %v478 = vpack.c.bf16 %v475, %v472
    %v480 = vunpack.c.l.b16 %v478
    %v481 = vunpack.c.h.b16 %v478
    %v482 = vpack.c.b16 %v480, %v480
    %v483 = vpack.c.b16 %v481, %v481
    %486 = vst [vmem:[%s5] sm:$0xf] %v482
    %487 = vst [vmem:[%s5 + $0x4] sm:$0xf] %v483
    // Predicated region
    $region34: #{basic_classifier_forward.1} parent=1 // pred_check
      _
    $region35: #{basic_classifier_forward.1} parent=1 // pred_check_branch
      %489 = sbr.rel (0) target = $region37
    $region36: #{basic_classifier_forward.1} parent=1 // pred_region
      _
    $region37: #{basic_classifier_forward.1} parent=1 // pred_fallthru
      _
    // Predicated region
    $region38: #{basic_classifier_forward.1} parent=1 // pred_check
      _
    $region39: #{basic_classifier_forward.1} parent=1 // pred_check_branch
      %491 = sbr.rel (0) target = $region41
    $region40: #{basic_classifier_forward.1} parent=1 // pred_region
      _
    $region41: #{basic_classifier_forward.1} parent=1 // pred_fallthru
      _
    %492 = vsyncpa [#allocation3], 1
    %493 = vsyncpa [#allocation5], 1

</llo_original>
